<compile_context>
chip_gen: v5e
topology: v5e:2x2
jax: 0.10.0
libtpu: 0.0.40
codegen_flags: <defaults>
</compile_context>

<pallas_src>
import functools

import jax
import jax.numpy as jnp
from jax.experimental import pallas as pl
from jax.experimental.pallas import tpu as pltpu

LANE = 128          # vreg lane width
SUBLANE = 8         # vreg sublane count (f32)
UNIT = SUBLANE * LANE
TM_MAX = 2048       # row tile (multiple of 8); 1 MiB f32 per input block
NSPLIT = 2          # reduction split across TensorCores (v7x); harmless on 1-TC chips
EPS = 1e-6


def _dice_kernel(*refs, tm, rows, inner, weighted, need_mask):
    if weighted:
        pred_ref, gt_ref, mask_ref, w_ref = refs[0:4]
        inter_ref, pm_ref, gm_ref = refs[4:7]
    else:
        pred_ref, gt_ref, mask_ref = refs[0:3]
        w_ref = None
        inter_ref, pm_ref, gm_ref = refs[3:6]

    s = pl.program_id(0)   # core / split axis ("parallel")
    j = pl.program_id(1)   # reduction axis ("arbitrary")

    @pl.when(j == 0)
    def _():
        inter_ref[...] = jnp.zeros_like(inter_ref)
        pm_ref[...] = jnp.zeros_like(pm_ref)
        gm_ref[...] = jnp.zeros_like(gm_ref)

    def _load():
        p = pred_ref[...].astype(jnp.float32)
        g = gt_ref[...].astype(jnp.float32)
        m = mask_ref[...].astype(jnp.float32)
        if weighted:
            m = m * w_ref[...].astype(jnp.float32)   # fused weights multiply
        return p, g, m

    def _fold(x):
        # (tm, LANE) -> (8, LANE): tile-aligned free view + pure VPU vreg adds.
        return x.reshape(tm // SUBLANE, SUBLANE, LANE).sum(axis=0)

    def _accumulate(p, g, m):
        pm = p * m
        gm = g * m
        inter_ref[...] += _fold(pm * g)
        pm_ref[...] += _fold(pm)
        gm_ref[...] += _fold(gm)

    if need_mask:
        bi = s * inner + j              # logical (unclamped) block index
        valid_rows = rows - bi * tm     # scalar; <=0 for fully out-of-range slots

        @pl.when(valid_rows >= tm)      # hot path: full block, no masking
        def _():
            _accumulate(*_load())

        @pl.when(valid_rows < tm)       # cold path: ragged / clamped block
        def _():
            p, g, m = _load()
            ok = jax.lax.broadcasted_iota(jnp.int32, (tm, LANE), 0) < valid_rows
            zero = jnp.float32(0)
            # Zero p and g too: OOB rows may contain NaN/Inf garbage and
            # 0 * NaN would poison the accumulators.
            _accumulate(jnp.where(ok, p, zero),
                        jnp.where(ok, g, zero),
                        jnp.where(ok, m, zero))
    else:
        _accumulate(*_load())


def dice_loss(pred, gt, mask, weights=None, eps=EPS, tm_max=TM_MAX):
    """JAX/Pallas equivalent of DiceLoss.forward.

    pred: (N, 1, H, W)   gt: (N, 1, H, W)   mask: (N, 1, H, W) or (N, H, W)
    weights: optional, same shape as mask after the channel squeeze
             (an (N, 1, H, W) weights tensor is tolerated).
    Returns a scalar float32 loss.
    """
    if pred.ndim == 4:
        pred = pred[:, 0, :, :]
        gt = gt[:, 0, :, :]
        if mask.ndim == 4:
            mask = mask[:, 0, :, :]
    assert pred.shape == gt.shape
    assert pred.shape == mask.shape

    weighted = weights is not None
    if weighted:
        if weights.ndim == mask.ndim + 1 and weights.shape[1] == 1:
            weights = weights[:, 0, :, :]
        assert weights.shape == mask.shape

    arrays = [pred, gt, mask] + ([weights] if weighted else [])
    flats = [jnp.reshape(a, (-1,)) for a in arrays]
    n = flats[0].shape[0]

    # Aligned prefix goes through the kernel; <1024-element tail is summed in
    # the wrapper (avoids a whole-array jnp.pad copy for misaligned inputs).
    n_aligned = (n // UNIT) * UNIT
    if n_aligned == 0:
        # Tiny input: pad to one (8,128) unit; the copy is negligible here.
        flats = [jnp.pad(f, (0, UNIT - n)) for f in flats]
        n_aligned = UNIT
        tails = None
    elif n_aligned < n:
        tails = [f[n_aligned:] for f in flats]
    else:
        tails = None
    slabs = [f[:n_aligned].reshape(-1, LANE) for f in flats]

    rows = slabs[0].shape[0]                        # multiple of 8
    tm = min(max(SUBLANE, (tm_max // SUBLANE) * SUBLANE), rows)
    nb = pl.cdiv(rows, tm)                          # number of row blocks
    # TODO(synk): query the actual TensorCore count instead of always using 2;
    # the 2-way split is a pure no-op (sequential) on 1-TC chips (v5e/v6e).
    ns = NSPLIT if nb >= NSPLIT else 1
    inner = pl.cdiv(nb, ns)
    need_mask = (rows % tm != 0) or (ns * inner != nb)

    def in_map(s, j):
        # Clamp overflow slots (when ns does not divide nb) onto the last valid
        # block; their contribution is fully masked out in the kernel.
        return (jnp.minimum(s * inner + j, nb - 1), 0)

    in_spec = pl.BlockSpec((tm, LANE), in_map)
    out_spec = pl.BlockSpec((None, SUBLANE, LANE), lambda s, j: (s, 0, 0))
    acc_shape = jax.ShapeDtypeStruct((ns, SUBLANE, LANE), jnp.float32)

    kernel = functools.partial(
        _dice_kernel, tm=tm, rows=rows, inner=inner,
        weighted=weighted, need_mask=need_mask)

    bytes_in = sum(int(a.size) * a.dtype.itemsize for a in slabs)
    cost = pl.CostEstimate(
        flops=6 * rows * LANE, transcendentals=0,
        bytes_accessed=bytes_in + 3 * ns * SUBLANE * LANE * 4)

    inter_acc, pm_acc, gm_acc = pl.pallas_call(
        kernel,
        out_shape=(acc_shape, acc_shape, acc_shape),
        grid_spec=pltpu.PrefetchScalarGridSpec(
            num_scalar_prefetch=0,
            grid=(ns, inner),
            in_specs=[in_spec] * len(slabs),
            out_specs=(out_spec, out_spec, out_spec),
        ),
        compiler_params=pltpu.CompilerParams(
            dimension_semantics=("parallel", "arbitrary")),
        cost_estimate=cost,
    )(*slabs)

    intersection = jnp.sum(inter_acc)
    sum_pm = jnp.sum(pm_acc)
    sum_gm = jnp.sum(gm_acc)

    if tails is not None:
        pt = tails[0].astype(jnp.float32)
        gtt = tails[1].astype(jnp.float32)
        mt = tails[2].astype(jnp.float32)
        if weighted:
            mt = mt * tails[3].astype(jnp.float32)
        pmt = pt * mt
        intersection = intersection + jnp.sum(pmt * gtt)
        sum_pm = sum_pm + jnp.sum(pmt)
        sum_gm = sum_gm + jnp.sum(gtt * mt)

    return 1.0 - 2.0 * intersection / (sum_pm + sum_gm + eps)


def _reference(pred, gt, mask, weights=None, eps=EPS):
    if pred.ndim == 4:
        pred = pred[:, 0, :, :]
        gt = gt[:, 0, :, :]
        if mask.ndim == 4:
            mask = mask[:, 0, :, :]
    if weights is not None:
        if weights.ndim == mask.ndim + 1 and weights.shape[1] == 1:
            weights = weights[:, 0, :, :]
        mask = weights * mask
    pred = pred.astype(jnp.float32)
    gt = gt.astype(jnp.float32)
    mask = mask.astype(jnp.float32)
    inter = jnp.sum(pred * gt * mask)
    union = jnp.sum(pred * mask) + jnp.sum(gt * mask) + eps
    return 1.0 - 2.0 * inter / union


if __name__ == "__main__":
    key = jax.random.PRNGKey(0)
    k1, k2, k3, k4 = jax.random.split(key, 4)

    # Primary small shape consistent with the module: (N, 1, H, W).
    N, C, H, W = 2, 1, 16, 16
    pred = jax.nn.sigmoid(jax.random.normal(k1, (N, C, H, W), jnp.float32))
    gt = (jax.random.uniform(k2, (N, C, H, W)) > 0.5).astype(jnp.float32)
    mask = (jax.random.uniform(k3, (N, C, H, W)) > 0.2).astype(jnp.float32)
    weights = jax.random.uniform(k4, (N, H, W), jnp.float32) + 0.5

    loss = dice_loss(pred, gt, mask, weights)
    jax.block_until_ready(loss)
    ref = _reference(pred, gt, mask, weights)
    assert jnp.allclose(loss, ref, atol=1e-5, rtol=1e-5), (loss, ref)
    assert float(loss) <= 1.0 + 1e-6

    # No-weights path.
    loss2 = dice_loss(pred, gt, mask)
    jax.block_until_ready(loss2)
    ref2 = _reference(pred, gt, mask)
    assert jnp.allclose(loss2, ref2, atol=1e-5, rtol=1e-5), (loss2, ref2)
    assert float(loss2) <= 1.0 + 1e-6

    # Misaligned shape exercising: multi-block grid, 2-way core split,
    # ragged last block, and the wrapper-side lane tail (3360 = 3072 + 288).
    N2, H2, W2 = 2, 42, 40
    p2 = jax.nn.sigmoid(jax.random.normal(k1, (N2, 1, H2, W2), jnp.float32))
    g2 = (jax.random.uniform(k2, (N2, 1, H2, W2)) > 0.5).astype(jnp.float32)
    m2 = (jax.random.uniform(k3, (N2, 1, H2, W2)) > 0.2).astype(jnp.float32)
    w2 = jax.random.uniform(k4, (N2, H2, W2), jnp.float32) + 0.5

    loss3 = dice_loss(p2, g2, m2, w2, tm_max=16)   # rows=24, tm=16 -> ragged block
    jax.block_until_ready(loss3)
    ref3 = _reference(p2, g2, m2, w2)
    assert jnp.allclose(loss3, ref3, atol=1e-5, rtol=1e-5), (loss3, ref3)
    assert float(loss3) <= 1.0 + 1e-6

    loss4 = dice_loss(p2, g2, m2, tm_max=8)        # rows=24, tm=8, nb=3 -> clamped slot
    jax.block_until_ready(loss4)
    ref4 = _reference(p2, g2, m2)
    assert jnp.allclose(loss4, ref4, atol=1e-5, rtol=1e-5), (loss4, ref4)
    assert float(loss4) <= 1.0 + 1e-6

    print("KERNEL_OK")
</pallas_src>

<mosaic_0001>
module attributes {stable_mosaic.version = 11 : i64} {
  func.func @_dice_kernel(%arg0: i32, %arg1: i32, %arg2: memref<8x128xf32, #tpu.memory_space<vmem>>, %arg3: memref<8x128xf32, #tpu.memory_space<vmem>>, %arg4: memref<8x128xf32, #tpu.memory_space<vmem>>, %arg5: memref<8x128xf32, #tpu.memory_space<vmem>>, %arg6: memref<1x8x128xf32, #tpu.memory_space<vmem>>, %arg7: memref<1x8x128xf32, #tpu.memory_space<vmem>>, %arg8: memref<1x8x128xf32, #tpu.memory_space<vmem>>) attributes {dimension_semantics = [#tpu.dimension_semantics<parallel>, #tpu.dimension_semantics<arbitrary>], iteration_bounds = array<i64: 1, 1>, scalar_prefetch = 0 : i64, scratch_operands = 0 : i64, tpu.core_type = #tpu.core_type<tc>, window_params = [{transform_indices = @transform_0, window_bounds = array<i64: 8, 128>}, {transform_indices = @transform_1, window_bounds = array<i64: 8, 128>}, {transform_indices = @transform_2, window_bounds = array<i64: 8, 128>}, {transform_indices = @transform_3, window_bounds = array<i64: 8, 128>}, {transform_indices = @transform_4, window_bounds = array<i64: 1, 8, 128>}, {transform_indices = @transform_5, window_bounds = array<i64: 1, 8, 128>}, {transform_indices = @transform_6, window_bounds = array<i64: 1, 8, 128>}]} {
    %c0_i32 = arith.constant 0 : i32
    %0 = arith.cmpi eq, %arg1, %c0_i32 : i32
    %1 = arith.extui %0 : i1 to i32
    %c0_i32_0 = arith.constant 0 : i32
    %2 = arith.cmpi ne, %1, %c0_i32_0 : i32
    scf.if %2 {
      %cst_28 = arith.constant 0.000000e+00 : f32
      %35 = vector.broadcast %cst_28 : f32 to vector<8x128xf32>
      %c0_29 = arith.constant 0 : index
      %c0_30 = arith.constant 0 : index
      %c0_31 = arith.constant 0 : index
      %36 = vector.load %arg6[%c0_29, %c0_30, %c0_31] : memref<1x8x128xf32, #tpu.memory_space<vmem>>, vector<1x8x128xf32>
      %37 = vector.shape_cast %36 : vector<1x8x128xf32> to vector<8x128xf32>
      %38 = vector.shape_cast %35 : vector<8x128xf32> to vector<1x8x128xf32>
      tpu.vector_store %arg6[%c0_29, %c0_30, %c0_31], %38 {strides = array<i32>} : memref<1x8x128xf32, #tpu.memory_space<vmem>>, vector<1x8x128xf32>,
      %cst_32 = arith.constant 0.000000e+00 : f32
      %39 = vector.broadcast %cst_32 : f32 to vector<8x128xf32>
      %c0_33 = arith.constant 0 : index
      %c0_34 = arith.constant 0 : index
      %c0_35 = arith.constant 0 : index
      %40 = vector.load %arg7[%c0_33, %c0_34, %c0_35] : memref<1x8x128xf32, #tpu.memory_space<vmem>>, vector<1x8x128xf32>
      %41 = vector.shape_cast %40 : vector<1x8x128xf32> to vector<8x128xf32>
      %42 = vector.shape_cast %39 : vector<8x128xf32> to vector<1x8x128xf32>
      tpu.vector_store %arg7[%c0_33, %c0_34, %c0_35], %42 {strides = array<i32>} : memref<1x8x128xf32, #tpu.memory_space<vmem>>, vector<1x8x128xf32>,
      %cst_36 = arith.constant 0.000000e+00 : f32
      %43 = vector.broadcast %cst_36 : f32 to vector<8x128xf32>
      %c0_37 = arith.constant 0 : index
      %c0_38 = arith.constant 0 : index
      %c0_39 = arith.constant 0 : index
      %44 = vector.load %arg8[%c0_37, %c0_38, %c0_39] : memref<1x8x128xf32, #tpu.memory_space<vmem>>, vector<1x8x128xf32>
      %45 = vector.shape_cast %44 : vector<1x8x128xf32> to vector<8x128xf32>
      %46 = vector.shape_cast %43 : vector<8x128xf32> to vector<1x8x128xf32>
      tpu.vector_store %arg8[%c0_37, %c0_38, %c0_39], %46 {strides = array<i32>} : memref<1x8x128xf32, #tpu.memory_space<vmem>>, vector<1x8x128xf32>,
    } else {
    }
    %c0 = arith.constant 0 : index
    %c0_1 = arith.constant 0 : index
    %3 = vector.load %arg2[%c0, %c0_1] : memref<8x128xf32, #tpu.memory_space<vmem>>, vector<8x128xf32>
    %c0_2 = arith.constant 0 : index
    %c0_3 = arith.constant 0 : index
    %4 = vector.load %arg3[%c0_2, %c0_3] : memref<8x128xf32, #tpu.memory_space<vmem>>, vector<8x128xf32>
    %c0_4 = arith.constant 0 : index
    %c0_5 = arith.constant 0 : index
    %5 = vector.load %arg4[%c0_4, %c0_5] : memref<8x128xf32, #tpu.memory_space<vmem>>, vector<8x128xf32>
    %c0_6 = arith.constant 0 : index
    %c0_7 = arith.constant 0 : index
    %6 = vector.load %arg5[%c0_6, %c0_7] : memref<8x128xf32, #tpu.memory_space<vmem>>, vector<8x128xf32>
    %7 = arith.mulf %5, %6 : vector<8x128xf32>
    %8 = arith.mulf %3, %7 : vector<8x128xf32>
    %9 = arith.mulf %4, %7 : vector<8x128xf32>
    %c0_8 = arith.constant 0 : index
    %c0_9 = arith.constant 0 : index
    %c0_10 = arith.constant 0 : index
    %10 = vector.load %arg6[%c0_8, %c0_9, %c0_10] : memref<1x8x128xf32, #tpu.memory_space<vmem>>, vector<1x8x128xf32>
    %11 = vector.shape_cast %10 : vector<1x8x128xf32> to vector<8x128xf32>
    %12 = arith.mulf %8, %4 : vector<8x128xf32>
    %13 = vector.shape_cast %12 : vector<8x128xf32> to vector<1x8x128xf32>
    %cst = arith.constant dense<0.000000e+00> : vector<8x128xf32>
    %14 = vector.multi_reduction <add>, %13, %cst [0] : vector<1x8x128xf32> to vector<8x128xf32>
    %15 = arith.addf %11, %14 : vector<8x128xf32>
    %c0_11 = arith.constant 0 : index
    %c0_12 = arith.constant 0 : index
    %c0_13 = arith.constant 0 : index
    %16 = vector.load %arg6[%c0_11, %c0_12, %c0_13] : memref<1x8x128xf32, #tpu.memory_space<vmem>>, vector<1x8x128xf32>
    %17 = vector.shape_cast %16 : vector<1x8x128xf32> to vector<8x128xf32>
    %18 = vector.shape_cast %15 : vector<8x128xf32> to vector<1x8x128xf32>
    tpu.vector_store %arg6[%c0_11, %c0_12, %c0_13], %18 {strides = array<i32>} : memref<1x8x128xf32, #tpu.memory_space<vmem>>, vector<1x8x128xf32>,
    %c0_14 = arith.constant 0 : index
    %c0_15 = arith.constant 0 : index
    %c0_16 = arith.constant 0 : index
    %19 = vector.load %arg7[%c0_14, %c0_15, %c0_16] : memref<1x8x128xf32, #tpu.memory_space<vmem>>, vector<1x8x128xf32>
    %20 = vector.shape_cast %19 : vector<1x8x128xf32> to vector<8x128xf32>
    %21 = vector.shape_cast %8 : vector<8x128xf32> to vector<1x8x128xf32>
    %cst_17 = arith.constant dense<0.000000e+00> : vector<8x128xf32>
    %22 = vector.multi_reduction <add>, %21, %cst_17 [0] : vector<1x8x128xf32> to vector<8x128xf32>
    %23 = arith.addf %20, %22 : vector<8x128xf32>
    %c0_18 = arith.constant 0 : index
    %c0_19 = arith.constant 0 : index
    %c0_20 = arith.constant 0 : index
    %24 = vector.load %arg7[%c0_18, %c0_19, %c0_20] : memref<1x8x128xf32, #tpu.memory_space<vmem>>, vector<1x8x128xf32>
    %25 = vector.shape_cast %24 : vector<1x8x128xf32> to vector<8x128xf32>
    %26 = vector.shape_cast %23 : vector<8x128xf32> to vector<1x8x128xf32>
    tpu.vector_store %arg7[%c0_18, %c0_19, %c0_20], %26 {strides = array<i32>} : memref<1x8x128xf32, #tpu.memory_space<vmem>>, vector<1x8x128xf32>,
    %c0_21 = arith.constant 0 : index
    %c0_22 = arith.constant 0 : index
    %c0_23 = arith.constant 0 : index
    %27 = vector.load %arg8[%c0_21, %c0_22, %c0_23] : memref<1x8x128xf32, #tpu.memory_space<vmem>>, vector<1x8x128xf32>
    %28 = vector.shape_cast %27 : vector<1x8x128xf32> to vector<8x128xf32>
    %29 = vector.shape_cast %9 : vector<8x128xf32> to vector<1x8x128xf32>
    %cst_24 = arith.constant dense<0.000000e+00> : vector<8x128xf32>
    %30 = vector.multi_reduction <add>, %29, %cst_24 [0] : vector<1x8x128xf32> to vector<8x128xf32>
    %31 = arith.addf %28, %30 : vector<8x128xf32>
    %c0_25 = arith.constant 0 : index
    %c0_26 = arith.constant 0 : index
    %c0_27 = arith.constant 0 : index
    %32 = vector.load %arg8[%c0_25, %c0_26, %c0_27] : memref<1x8x128xf32, #tpu.memory_space<vmem>>, vector<1x8x128xf32>
    %33 = vector.shape_cast %32 : vector<1x8x128xf32> to vector<8x128xf32>
    %34 = vector.shape_cast %31 : vector<8x128xf32> to vector<1x8x128xf32>
    tpu.vector_store %arg8[%c0_25, %c0_26, %c0_27], %34 {strides = array<i32>} : memref<1x8x128xf32, #tpu.memory_space<vmem>>, vector<1x8x128xf32>,
    return
  }
  func.func @transform_0(%arg0: i32, %arg1: i32) -> (i32, i32) {
    %c1_i32 = arith.constant 1 : i32
    %0 = arith.muli %arg0, %c1_i32 : i32
    %1 = arith.addi %0, %arg1 : i32
    %c0_i32 = arith.constant 0 : i32
    %2 = arith.minsi %1, %c0_i32 : i32
    %c0_i32_0 = arith.constant 0 : i32
    %c0_i32_1 = arith.constant 0 : i32
    return %2, %c0_i32_0 : i32, i32
  }
  func.func @transform_1(%arg0: i32, %arg1: i32) -> (i32, i32) {
    %c1_i32 = arith.constant 1 : i32
    %0 = arith.muli %arg0, %c1_i32 : i32
    %1 = arith.addi %0, %arg1 : i32
    %c0_i32 = arith.constant 0 : i32
    %2 = arith.minsi %1, %c0_i32 : i32
    %c0_i32_0 = arith.constant 0 : i32
    %c0_i32_1 = arith.constant 0 : i32
    return %2, %c0_i32_0 : i32, i32
  }
  func.func @transform_2(%arg0: i32, %arg1: i32) -> (i32, i32) {
    %c1_i32 = arith.constant 1 : i32
    %0 = arith.muli %arg0, %c1_i32 : i32
    %1 = arith.addi %0, %arg1 : i32
    %c0_i32 = arith.constant 0 : i32
    %2 = arith.minsi %1, %c0_i32 : i32
    %c0_i32_0 = arith.constant 0 : i32
    %c0_i32_1 = arith.constant 0 : i32
    return %2, %c0_i32_0 : i32, i32
  }
  func.func @transform_3(%arg0: i32, %arg1: i32) -> (i32, i32) {
    %c1_i32 = arith.constant 1 : i32
    %0 = arith.muli %arg0, %c1_i32 : i32
    %1 = arith.addi %0, %arg1 : i32
    %c0_i32 = arith.constant 0 : i32
    %2 = arith.minsi %1, %c0_i32 : i32
    %c0_i32_0 = arith.constant 0 : i32
    %c0_i32_1 = arith.constant 0 : i32
    return %2, %c0_i32_0 : i32, i32
  }
  func.func @transform_4(%arg0: i32, %arg1: i32) -> (i32, i32, i32) {
    %c0_i32 = arith.constant 0 : i32
    %c0_i32_0 = arith.constant 0 : i32
    %c0_i32_1 = arith.constant 0 : i32
    return %arg0, %c0_i32, %c0_i32_0 : i32, i32, i32
  }
  func.func @transform_5(%arg0: i32, %arg1: i32) -> (i32, i32, i32) {
    %c0_i32 = arith.constant 0 : i32
    %c0_i32_0 = arith.constant 0 : i32
    %c0_i32_1 = arith.constant 0 : i32
    return %arg0, %c0_i32, %c0_i32_0 : i32, i32, i32
  }
  func.func @transform_6(%arg0: i32, %arg1: i32) -> (i32, i32, i32) {
    %c0_i32 = arith.constant 0 : i32
    %c0_i32_0 = arith.constant 0 : i32
    %c0_i32_1 = arith.constant 0 : i32
    return %arg0, %c0_i32, %c0_i32_0 : i32, i32, i32
  }
}

</mosaic_0001>

<llo_original>
// kernel: tpu_custom_call.1
$region0: #{tpu_custom_call.1}
  #allocation0 [shape = 'u32[]', space=smem, size = 0x4, offset = 0x4, fixed_abs, tag = 'smem constant byte address 0x4 - core index']
  #allocation1 [shape = 'u32[72,128]{1,0:T(1,128)}', space=vmem, size = 0x9000, scoped, tag = 'internal scratch']
  %s0 = inlined_call_operand.hbm [shape: f32[8,128], index: 0, kind: input, shape index: {}]
  %s1 = inlined_call_operand.hbm [shape: f32[8,128], index: 1, kind: input, shape index: {}]
  %s2 = inlined_call_operand.hbm [shape: f32[8,128], index: 2, kind: input, shape index: {}]
  %s3 = inlined_call_operand.hbm [shape: f32[8,128], index: 3, kind: input, shape index: {}]
  %s4 = inlined_call_operand.hbm [shape: f32[1,8,128], index: 4, kind: output, shape index: {0}]
  %s5 = inlined_call_operand.hbm [shape: f32[1,8,128], index: 5, kind: output, shape index: {1}]
  %s6 = inlined_call_operand.hbm [shape: f32[1,8,128], index: 6, kind: output, shape index: {2}]
  %7 = xla_tuple %s4, %s5, %s6
  %s8 = sld [smem:[#allocation0]]
  $region62: #{tpu_custom_call.1} parent=0
    _
  %s10 = ssub.s32 1, %s8
  %s11 = scalar_select 0, %s10, %s8
  $region1: #{tpu_custom_call.1} parent=0
    #allocation2 [shape = 'u8[4096]{0}', space=vmem, size = 0x1000, scoped, tag = 'input window, operand 0, single buffered']
    #allocation3 [shape = 's32[1]{0}', space=sflag, size = 0x4, scoped, tag = 'scoped memory for tpu_custom_call.1']
    #allocation4 [shape = 's32[1]{0}', space=sflag, size = 0x4, scoped, tag = 'scoped memory for tpu_custom_call.1']
    #allocation5 [shape = 'u8[4096]{0}', space=vmem, size = 0x1000, scoped, tag = 'input window, operand 1, single buffered']
    #allocation6 [shape = 's32[1]{0}', space=sflag, size = 0x4, scoped, tag = 'scoped memory for tpu_custom_call.1']
    #allocation7 [shape = 'u8[4096]{0}', space=vmem, size = 0x1000, scoped, tag = 'input window, operand 2, single buffered']
    #allocation8 [shape = 'u8[4096]{0}', space=vmem, size = 0x1000, scoped, tag = 'input window, operand 3, single buffered']
    #allocation9 [shape = 's32[1]{0}', space=sflag, size = 0x4, scoped, tag = 'scoped memory for tpu_custom_call.1']
    #allocation10 [shape = 'u8[4096]{0}', space=vmem, size = 0x1000, scoped, tag = 'output window, operand 0, single buffered']
    #allocation11 [shape = 'u8[4096]{0}', space=vmem, size = 0x1000, scoped, tag = 'output window, operand 1, single buffered']
    #allocation12 [shape = 's32[1]{0}', space=sflag, size = 0x4, scoped, tag = 'scoped memory for tpu_custom_call.1']
    #allocation13 [shape = 'u8[4096]{0}', space=vmem, size = 0x1000, scoped, tag = 'output window, operand 2, single buffered']
    %12 = vsyncpa [#allocation3], 0
    %13 = vsyncpa [#allocation6], 0
    %14 = vsyncpa [#allocation9], 0
    %15 = vsyncpa [#allocation4], 0
    %16 = vsyncpa [#allocation12], 0
    // Predicated region
    $region2: #{tpu_custom_call.1} parent=1 // pred_check
      _
    $region3: #{tpu_custom_call.1} parent=1 // pred_check_branch
      %18 = sbr.rel (0) target = $region5
    $region4: #{tpu_custom_call.1} parent=1 // pred_region
      %s19 = sadd.s32 0, 0
      %p20 = scmp.lt.s32.totalorder %s19, 0
      %s21 = scalar_select %p20, %s19, 0
      %23 = vsyncadd [#allocation3], 0
      %s24 = smul.addr %s21, 8
      %s25 = scalar_lea.hbm %s0, %s24
      %s27 = sshll.u32 %s25, 4
      %s28 = int_to_ptr.hbm [resolvable:$true] %s27
      %s29 = sshll.u32 [#allocation2], 4
      %s30 = int_to_ptr.vmem [resolvable:$true] %s29
      %32 = dma.hbm_to_vmem [thread:$0]  %s28, 128, %s30, [#allocation3]
    $region5: #{tpu_custom_call.1} parent=1 // pred_fallthru
      _
    // Predicated region
    $region6: #{tpu_custom_call.1} parent=1 // pred_check
      _
    $region7: #{tpu_custom_call.1} parent=1 // pred_check_branch
      %34 = sbr.rel (0) target = $region9
    $region8: #{tpu_custom_call.1} parent=1 // pred_region
      %s35 = sadd.s32 0, 0
      %p36 = scmp.lt.s32.totalorder %s35, 0
      %s37 = scalar_select %p36, %s35, 0
      %39 = vsyncadd [#allocation6], 0
      %s40 = smul.addr %s37, 8
      %s41 = scalar_lea.hbm %s1, %s40
      %s43 = sshll.u32 %s41, 4
      %s44 = int_to_ptr.hbm [resolvable:$true] %s43
      %s45 = sshll.u32 [#allocation5], 4
      %s46 = int_to_ptr.vmem [resolvable:$true] %s45
      %48 = dma.hbm_to_vmem [thread:$0]  %s44, 128, %s46, [#allocation6]
    $region9: #{tpu_custom_call.1} parent=1 // pred_fallthru
      _
    // Predicated region
    $region10: #{tpu_custom_call.1} parent=1 // pred_check
      _
    $region11: #{tpu_custom_call.1} parent=1 // pred_check_branch
      %50 = sbr.rel (0) target = $region13
    $region12: #{tpu_custom_call.1} parent=1 // pred_region
      %s51 = sadd.s32 0, 0
      %p52 = scmp.lt.s32.totalorder %s51, 0
      %s53 = scalar_select %p52, %s51, 0
      %55 = vsyncadd [#allocation6], 0
      %s56 = smul.addr %s53, 8
      %s57 = scalar_lea.hbm %s2, %s56
      %s59 = sshll.u32 %s57, 4
      %s60 = int_to_ptr.hbm [resolvable:$true] %s59
      %s61 = sshll.u32 [#allocation7], 4
      %s62 = int_to_ptr.vmem [resolvable:$true] %s61
      %64 = dma.hbm_to_vmem [thread:$0]  %s60, 128, %s62, [#allocation6]
    $region13: #{tpu_custom_call.1} parent=1 // pred_fallthru
      _
    // Predicated region
    $region14: #{tpu_custom_call.1} parent=1 // pred_check
      _
    $region15: #{tpu_custom_call.1} parent=1 // pred_check_branch
      %66 = sbr.rel (0) target = $region17
    $region16: #{tpu_custom_call.1} parent=1 // pred_region
      %s67 = sadd.s32 0, 0
      %p68 = scmp.lt.s32.totalorder %s67, 0
      %s69 = scalar_select %p68, %s67, 0
      %71 = vsyncadd [#allocation9], 0
      %s72 = smul.addr %s69, 8
      %s73 = scalar_lea.hbm %s3, %s72
      %s75 = sshll.u32 %s73, 4
      %s76 = int_to_ptr.hbm [resolvable:$true] %s75
      %s77 = sshll.u32 [#allocation8], 4
      %s78 = int_to_ptr.vmem [resolvable:$true] %s77
      %80 = dma.hbm_to_vmem [thread:$0]  %s76, 128, %s78, [#allocation9]
    $region17: #{tpu_custom_call.1} parent=1 // pred_fallthru
      _
    // Predicated region
    $region18: #{tpu_custom_call.1} parent=1 // pred_check
      _
    $region19: #{tpu_custom_call.1} parent=1 // pred_check_branch
      %82 = sbr.rel (0) target = $region21
    $region20: #{tpu_custom_call.1} parent=1 // pred_region
      %84 = dma.done [#allocation3], 128
    $region21: #{tpu_custom_call.1} parent=1 // pred_fallthru
      _
    // Predicated region
    $region22: #{tpu_custom_call.1} parent=1 // pred_check
      _
    $region23: #{tpu_custom_call.1} parent=1 // pred_check_branch
      %86 = sbr.rel (0) target = $region25
    $region24: #{tpu_custom_call.1} parent=1 // pred_region
      %88 = dma.done [#allocation6], 128
    $region25: #{tpu_custom_call.1} parent=1 // pred_fallthru
      _
    // Predicated region
    $region26: #{tpu_custom_call.1} parent=1 // pred_check
      _
    $region27: #{tpu_custom_call.1} parent=1 // pred_check_branch
      %90 = sbr.rel (0) target = $region29
    $region28: #{tpu_custom_call.1} parent=1 // pred_region
      %92 = dma.done [#allocation6], 128
    $region29: #{tpu_custom_call.1} parent=1 // pred_fallthru
      _
    // Predicated region
    $region30: #{tpu_custom_call.1} parent=1 // pred_check
      _
    $region31: #{tpu_custom_call.1} parent=1 // pred_check_branch
      %94 = sbr.rel (0) target = $region33
    $region32: #{tpu_custom_call.1} parent=1 // pred_region
      %96 = dma.done [#allocation9], 128
    $region33: #{tpu_custom_call.1} parent=1 // pred_fallthru
      _
    %s97 = sadd.s32 0, 0
    %p98 = scmp.lt.s32.totalorder %s97, 0
    %s99 = scalar_select %p98, %s97, 0
    %s100 = sadd.s32 0, 0
    %p101 = scmp.lt.s32.totalorder %s100, 0
    %s102 = scalar_select %p101, %s100, 0
    %s103 = sadd.s32 0, 0
    %p104 = scmp.lt.s32.totalorder %s103, 0
    %s105 = scalar_select %p104, %s103, 0
    %s106 = sadd.s32 0, 0
    %p107 = scmp.lt.s32.totalorder %s106, 0
    %s108 = scalar_select %p107, %s106, 0
    %p109 = scmp.eq.s32.totalorder 0, 0
    // Predicated region
    $region34: #{tpu_custom_call.1} parent=1 // pred_check
      %p110 = pneg %p109
    $region35: #{tpu_custom_call.1} parent=1 // pred_check_branch
      %112 = sbr.rel (%p110) target = $region37
    $region36: #{tpu_custom_call.1} parent=1 // pred_region
      %113 = vst [vmem:[#allocation10] sm:$0xff] 0.0
      %114 = vst [vmem:[#allocation11] sm:$0xff] 0.0
      %115 = vst [vmem:[#allocation13] sm:$0xff] 0.0
    $region37: #{tpu_custom_call.1} parent=1 // pred_fallthru
      _
    %v116 = vld [vmem:[#allocation2] sm:$0xff]
    %v117 = vld [vmem:[#allocation5] sm:$0xff]
    %v118 = vld [vmem:[#allocation7] sm:$0xff]
    %v119 = vld [vmem:[#allocation8] sm:$0xff]
    %v120 = vmul.f32 %v118, %v119
    %v121 = vmul.f32 %v116, %v120
    %v122 = vmul.f32 %v117, %v120
    %v123 = vld [vmem:[#allocation10] sm:$0xff]
    %v124 = vmul.f32 %v121, %v117
    %v125 = vadd.f32 %v124, 0.0
    %v126 = vadd.f32 %v123, %v125
    %127 = vst [vmem:[#allocation10] sm:$0xff] %v126
    %v128 = vld [vmem:[#allocation11] sm:$0xff]
    %v129 = vadd.f32 %v121, 0.0
    %v130 = vadd.f32 %v128, %v129
    %131 = vst [vmem:[#allocation11] sm:$0xff] %v130
    %v132 = vld [vmem:[#allocation13] sm:$0xff]
    %v133 = vadd.f32 %v122, 0.0
    %v134 = vadd.f32 %v132, %v133
    %135 = vst [vmem:[#allocation13] sm:$0xff] %v134
    // Predicated region
    $region38: #{tpu_custom_call.1} parent=1 // pred_check
      _
    $region39: #{tpu_custom_call.1} parent=1 // pred_check_branch
      %137 = sbr.rel (0) target = $region41
    $region40: #{tpu_custom_call.1} parent=1 // pred_region
      %139 = vsyncadd [#allocation4], 0
      %s141 = sshll.u32 [#allocation10], 4
      %s142 = int_to_ptr.vmem [resolvable:$true] %s141
      %s143 = sshll.u32 %s4, 4
      %s144 = int_to_ptr.hbm [resolvable:$true] %s143
      %146 = dma.vmem_to_hbm [thread:$0]  %s142, 128, %s144, [#allocation4]
    $region41: #{tpu_custom_call.1} parent=1 // pred_fallthru
      _
    // Predicated region
    $region42: #{tpu_custom_call.1} parent=1 // pred_check
      _
    $region43: #{tpu_custom_call.1} parent=1 // pred_check_branch
      %148 = sbr.rel (0) target = $region45
    $region44: #{tpu_custom_call.1} parent=1 // pred_region
      %150 = vsyncadd [#allocation12], 0
      %s152 = sshll.u32 [#allocation11], 4
      %s153 = int_to_ptr.vmem [resolvable:$true] %s152
      %s154 = sshll.u32 %s5, 4
      %s155 = int_to_ptr.hbm [resolvable:$true] %s154
      %157 = dma.vmem_to_hbm [thread:$0]  %s153, 128, %s155, [#allocation12]
    $region45: #{tpu_custom_call.1} parent=1 // pred_fallthru
      _
    // Predicated region
    $region46: #{tpu_custom_call.1} parent=1 // pred_check
      _
    $region47: #{tpu_custom_call.1} parent=1 // pred_check_branch
      %159 = sbr.rel (0) target = $region49
    $region48: #{tpu_custom_call.1} parent=1 // pred_region
      %161 = vsyncadd [#allocation12], 0
      %s163 = sshll.u32 [#allocation13], 4
      %s164 = int_to_ptr.vmem [resolvable:$true] %s163
      %s165 = sshll.u32 %s6, 4
      %s166 = int_to_ptr.hbm [resolvable:$true] %s165
      %168 = dma.vmem_to_hbm [thread:$0]  %s164, 128, %s166, [#allocation12]
    $region49: #{tpu_custom_call.1} parent=1 // pred_fallthru
      _
    // Predicated region
    $region50: #{tpu_custom_call.1} parent=1 // pred_check
      _
    $region51: #{tpu_custom_call.1} parent=1 // pred_check_branch
      %170 = sbr.rel (0) target = $region53
    $region52: #{tpu_custom_call.1} parent=1 // pred_region
      %172 = dma.done [#allocation4], 128
    $region53: #{tpu_custom_call.1} parent=1 // pred_fallthru
      _
    // Predicated region
    $region54: #{tpu_custom_call.1} parent=1 // pred_check
      _
    $region55: #{tpu_custom_call.1} parent=1 // pred_check_branch
      %174 = sbr.rel (0) target = $region57
    $region56: #{tpu_custom_call.1} parent=1 // pred_region
      %176 = dma.done [#allocation12], 128
    $region57: #{tpu_custom_call.1} parent=1 // pred_fallthru
      _
    // Predicated region
    $region58: #{tpu_custom_call.1} parent=1 // pred_check
      _
    $region59: #{tpu_custom_call.1} parent=1 // pred_check_branch
      %178 = sbr.rel (0) target = $region61
    $region60: #{tpu_custom_call.1} parent=1 // pred_region
      %180 = dma.done [#allocation12], 128
    $region61: #{tpu_custom_call.1} parent=1 // pred_fallthru
      _
    %181 = vsyncpa [#allocation3], 1
    %182 = vsyncpa [#allocation6], 1
    %183 = vsyncpa [#allocation9], 1
    %184 = vsyncpa [#allocation4], 1
    %185 = vsyncpa [#allocation12], 1

</llo_original>
